<compile_context>
chip_gen: v7x
topology: tpu7x:2x2x1
jax: 0.10.0
libtpu: 0.0.40
codegen_flags: <defaults>
</compile_context>

<pallas_src>
import math

import jax
import jax.numpy as jnp
from jax.experimental import pallas as pl
from jax.experimental.pallas import tpu as pltpu


def _self_attention_kernel(x_ref, wt_ref, b_ref, o_ref):
    # x_ref: (Bt, N, H) block, wt_ref: (H, H) pre-transposed (in, out),
    # b_ref: (1, H), o_ref: (Bt, N, H)
    bt, n, h = x_ref.shape

    # Linear projection with batch folded into the matmul M dimension:
    # one (Bt*N, H) @ (H, H) matmul. This is Q == K == V in the reference.
    x2 = x_ref[...].reshape(bt * n, h)                       # leading-dim collapse only
    q2 = jnp.dot(x2, wt_ref[...], preferred_element_type=jnp.float32) + b_ref[...]
    q = q2.reshape(bt, n, h)                                 # (Bt, N, H) f32

    # Attention scores: batched Q @ K^T / sqrt(H). Contraction on the last dim
    # of both operands -> no explicit transpose of q.
    scores = jnp.einsum("bnh,bmh->bnm", q, q,
                        preferred_element_type=jnp.float32)  # (Bt, N, N)
    scores = scores * (1.0 / math.sqrt(h))

    # Softmax along the last dim (numerically stable, matches torch Softmax).
    scores = scores - scores.max(axis=-1, keepdims=True)
    p = jnp.exp(scores)
    p = p * pl.reciprocal(p.sum(axis=-1, keepdims=True), approx=True)

    # Attention output: probs @ V.
    out = jnp.einsum("bnm,bmh->bnh", p, q,
                     preferred_element_type=jnp.float32)     # (Bt, N, H)
    o_ref[...] = out.astype(o_ref.dtype)


def self_attention_pallas(particles, w_query, b_query, *, block_b=None):
    """particles: (B, N, H) f32; w_query: (H, H) (PyTorch out x in); b_query: (H,)."""
    B, N, H = particles.shape
    if block_b is None:
        block_b = B                      # fold the whole batch into one grid step
    assert B % block_b == 0
    grid = (B // block_b,)

    wt = jnp.asarray(w_query).T          # one-time transpose in the wrapper (XLA)
    b2d = jnp.asarray(b_query).reshape(1, H)

    return pl.pallas_call(
        _self_attention_kernel,
        out_shape=jax.ShapeDtypeStruct((B, N, H), particles.dtype),
        grid_spec=pltpu.PrefetchScalarGridSpec(
            num_scalar_prefetch=0,
            grid=grid,
            in_specs=[
                pl.BlockSpec((block_b, N, H), lambda i: (i, 0, 0)),  # batch tile
                pl.BlockSpec((H, H), lambda i: (0, 0)),              # shared W^T
                pl.BlockSpec((1, H), lambda i: (0, 0)),              # shared bias
            ],
            out_specs=pl.BlockSpec((block_b, N, H), lambda i: (i, 0, 0)),
        ),
        compiler_params=pltpu.CompilerParams(
            dimension_semantics=("parallel",),
            vmem_limit_bytes=32 * 1024 * 1024,
        ),
    )(particles, wt, b2d)


def self_attention_reference(particles, w_query, b_query):
    q = jnp.einsum("bnh,oh->bno", particles, w_query) + b_query
    scores = jnp.einsum("bnh,bmh->bnm", q, q) / math.sqrt(q.shape[-1])
    probs = jax.nn.softmax(scores, axis=-1)
    return jnp.einsum("bnm,bmh->bnh", probs, q)


if __name__ == "__main__":
    B, N, H = 2, 8, 32
    key = jax.random.PRNGKey(0)
    kx, kw, kb = jax.random.split(key, 3)

    particles = jax.random.normal(kx, (B, N, H), dtype=jnp.float32)

    # Deterministic parameter init mirroring nn.Linear(hidden, hidden) shapes:
    # weight (H, H), bias (H,). key/value layers are unused by forward().
    bound = 1.0 / math.sqrt(H)
    w_query = jax.random.uniform(kw, (H, H), jnp.float32, -bound, bound)
    b_query = jax.random.uniform(kb, (H,), jnp.float32, -bound, bound)

    out = self_attention_pallas(particles, w_query, b_query)
    out = jax.block_until_ready(out)

    ref = self_attention_reference(particles, w_query, b_query)
    assert out.shape == (B, N, H)
    # Tolerance loosened slightly vs. 1e-5 to accommodate the EUP approximate
    # reciprocal used for the softmax denominator.
    assert jnp.allclose(out, ref, atol=2e-3, rtol=2e-3)

    print("KERNEL_OK")
</pallas_src>

<mosaic_0001>
module attributes {stable_mosaic.version = 11 : i64} {
  func.func @_self_attention_kernel(%arg0: i32, %arg1: memref<2x8x32xf32, #tpu.memory_space<vmem>>, %arg2: memref<32x32xf32, #tpu.memory_space<vmem>>, %arg3: memref<1x32xf32, #tpu.memory_space<vmem>>, %arg4: memref<2x8x32xf32, #tpu.memory_space<vmem>>) attributes {dimension_semantics = [#tpu.dimension_semantics<parallel>], iteration_bounds = array<i64: 1>, scalar_prefetch = 0 : i64, scratch_operands = 0 : i64, tpu.core_type = #tpu.core_type<tc>, window_params = [{transform_indices = @transform_0, window_bounds = array<i64: 2, 8, 32>}, {pipeline_mode = #tpu.pipeline_mode<synchronous>, transform_indices = @transform_1, window_bounds = array<i64: 32, 32>}, {pipeline_mode = #tpu.pipeline_mode<synchronous>, transform_indices = @transform_2, window_bounds = array<i64: 1, 32>}, {transform_indices = @transform_3, window_bounds = array<i64: 2, 8, 32>}]} {
    %c0 = arith.constant 0 : index
    %c0_0 = arith.constant 0 : index
    %c0_1 = arith.constant 0 : index
    %0 = vector.load %arg1[%c0, %c0_0, %c0_1] : memref<2x8x32xf32, #tpu.memory_space<vmem>>, vector<2x8x32xf32>
    %1 = vector.shape_cast %0 : vector<2x8x32xf32> to vector<16x32xf32>
    %c0_2 = arith.constant 0 : index
    %c0_3 = arith.constant 0 : index
    %2 = vector.load %arg2[%c0_2, %c0_3] : memref<32x32xf32, #tpu.memory_space<vmem>>, vector<32x32xf32>
    %cst = arith.constant dense<0.000000e+00> : vector<16x32xf32>
    %3 = tpu.matmul %1, %2, %cst {dimension_numbers = #tpu.dot_dimension_numbers<[1], [0], [0], [1], [0, 0, 1, 1], [], []>} : vector<16x32xf32>, vector<32x32xf32>, vector<16x32xf32> -> vector<16x32xf32>
    %c0_4 = arith.constant 0 : index
    %c0_5 = arith.constant 0 : index
    %4 = vector.load %arg3[%c0_4, %c0_5] : memref<1x32xf32, #tpu.memory_space<vmem>>, vector<1x32xf32>
    %5 = vector.broadcast %4 : vector<1x32xf32> to vector<16x32xf32>
    %6 = arith.addf %3, %5 : vector<16x32xf32>
    %7 = vector.shape_cast %6 : vector<16x32xf32> to vector<2x8x32xf32>
    "tpu.trace_start"() <{level = 10 : i32, message = "bnh,bmh->bnm"}> : () -> ()
    %cst_6 = arith.constant dense<0.000000e+00> : vector<2x8x8xf32>
    %8 = tpu.matmul %7, %7, %cst_6 {dimension_numbers = #tpu.dot_dimension_numbers<[2], [2], [1], [1], [0, 0, 0, 1, 1, 1], [0], [0]>} : vector<2x8x32xf32>, vector<2x8x32xf32>, vector<2x8x8xf32> -> vector<2x8x8xf32>
    "tpu.trace_stop"() : () -> ()
    %cst_7 = arith.constant 0.176776692 : f32
    %9 = vector.broadcast %cst_7 : f32 to vector<2x8x8xf32>
    %10 = arith.mulf %8, %9 : vector<2x8x8xf32>
    %cst_8 = arith.constant dense<0xFF800000> : vector<2x8xf32>
    %11 = vector.multi_reduction <maximumf>, %10, %cst_8 [2] : vector<2x8x8xf32> to vector<2x8xf32>
    %12 = vector.shape_cast %11 : vector<2x8xf32> to vector<2x8x1xf32>
    %13 = vector.broadcast %12 : vector<2x8x1xf32> to vector<2x8x8xf32>
    %14 = arith.subf %10, %13 : vector<2x8x8xf32>
    %15 = math.exp %14 : vector<2x8x8xf32>
    %cst_9 = arith.constant dense<0.000000e+00> : vector<2x8xf32>
    %16 = vector.multi_reduction <add>, %15, %cst_9 [2] : vector<2x8x8xf32> to vector<2x8xf32>
    %17 = vector.shape_cast %16 : vector<2x8xf32> to vector<2x8x1xf32>
    %18 = tpu.reciprocal %17 {approx = true} : vector<2x8x1xf32> -> vector<2x8x1xf32>
    %19 = vector.broadcast %18 : vector<2x8x1xf32> to vector<2x8x8xf32>
    %20 = arith.mulf %15, %19 : vector<2x8x8xf32>
    "tpu.trace_start"() <{level = 10 : i32, message = "bnm,bmh->bnh"}> : () -> ()
    %cst_10 = arith.constant dense<0.000000e+00> : vector<2x8x32xf32>
    %21 = tpu.matmul %20, %7, %cst_10 {dimension_numbers = #tpu.dot_dimension_numbers<[2], [1], [1], [2], [0, 0, 0, 1, 1, 2], [0], [0]>} : vector<2x8x8xf32>, vector<2x8x32xf32>, vector<2x8x32xf32> -> vector<2x8x32xf32>
    "tpu.trace_stop"() : () -> ()
    %c0_11 = arith.constant 0 : index
    %c0_12 = arith.constant 0 : index
    %c0_13 = arith.constant 0 : index
    %22 = vector.load %arg4[%c0_11, %c0_12, %c0_13] : memref<2x8x32xf32, #tpu.memory_space<vmem>>, vector<2x8x32xf32>
    tpu.vector_store %arg4[%c0_11, %c0_12, %c0_13], %21 {strides = array<i32>} : memref<2x8x32xf32, #tpu.memory_space<vmem>>, vector<2x8x32xf32>,
    return
  }
  func.func @transform_0(%arg0: i32) -> (i32, i32, i32) {
    %c0_i32 = arith.constant 0 : i32
    %c0_i32_0 = arith.constant 0 : i32
    %c0_i32_1 = arith.constant 0 : i32
    return %arg0, %c0_i32, %c0_i32_0 : i32, i32, i32
  }
  func.func @transform_1(%arg0: i32) -> (i32, i32) {
    %c0_i32 = arith.constant 0 : i32
    %c0_i32_0 = arith.constant 0 : i32
    %c0_i32_1 = arith.constant 0 : i32
    return %c0_i32, %c0_i32_0 : i32, i32
  }
  func.func @transform_2(%arg0: i32) -> (i32, i32) {
    %c0_i32 = arith.constant 0 : i32
    %c0_i32_0 = arith.constant 0 : i32
    %c0_i32_1 = arith.constant 0 : i32
    return %c0_i32, %c0_i32_0 : i32, i32
  }
  func.func @transform_3(%arg0: i32) -> (i32, i32, i32) {
    %c0_i32 = arith.constant 0 : i32
    %c0_i32_0 = arith.constant 0 : i32
    %c0_i32_1 = arith.constant 0 : i32
    return %arg0, %c0_i32, %c0_i32_0 : i32, i32, i32
  }
}

</mosaic_0001>

<llo_original>
// kernel: tpu_custom_call.1
$region0: #{tpu_custom_call.1}
  #allocation0 [shape = 'u32[]', space=smem, size = 0x4, offset = 0x4, fixed_abs, tag = 'smem constant byte address 0x4 - core index']
  #allocation1 [shape = 'u32[144,128]{1,0:T(1,128)}', space=vmem, size = 0x12000, scoped, tag = 'internal scratch']
  %s0 = inlined_call_operand.hbm [shape: f32[2,8,32], index: 0, kind: input, shape index: {}]
  %s1 = inlined_call_operand.hbm [shape: f32[32,32], index: 1, kind: input, shape index: {}]
  %s2 = inlined_call_operand.vmem [shape: f32[1,32], index: 2, kind: input, shape index: {}]
  %s3 = inlined_call_operand.hbm [shape: f32[2,8,32], index: 3, kind: output, shape index: {}]
  %s4 = sld [smem:[#allocation0]]
  $region30: #{tpu_custom_call.1} parent=0
    _
  %s6 = ssub.s32 1, %s4
  %s7 = scalar_select 0, %s6, %s4
  $region1: #{tpu_custom_call.1} parent=0
    #allocation2 [shape = 'u8[8192]{0}', space=vmem, size = 0x2000, scoped, tag = 'input window, operand 0, single buffered']
    #allocation3 [shape = 's32[1]{0}', space=sflag, size = 0x4, scoped, tag = 'scoped memory for tpu_custom_call.1']
    #allocation4 [shape = 's32[1]{0}', space=sflag, size = 0x4, scoped, tag = 'scoped memory for tpu_custom_call.1']
    #allocation5 [shape = 'u8[16384]{0}', space=vmem, size = 0x4000, scoped, tag = 'input window, operand 1, single buffered']
    #allocation6 [shape = 's32[1]{0}', space=sflag, size = 0x4, scoped, tag = 'scoped memory for tpu_custom_call.1']
    #allocation7 [shape = 'u8[8192]{0}', space=vmem, size = 0x2000, scoped, tag = 'output window, operand 0, single buffered']
    %8 = vsyncpa [#allocation3], 0
    %9 = vsyncpa [#allocation6], 0
    %10 = vsyncpa [#allocation4], 0
    // Predicated region
    $region2: #{tpu_custom_call.1} parent=1 // pred_check
      _
    $region3: #{tpu_custom_call.1} parent=1 // pred_check_branch
      %12 = sbr.rel (0) target = $region5
    $region4: #{tpu_custom_call.1} parent=1 // pred_region
      %s14 = ssub.s32 256, 256
      %15 = vsyncadd [#allocation3], %s14
      %s16 = sshll.u32 [#allocation2], 4
      %s17 = int_to_ptr.vmem [resolvable:$true] %s16
      %22 = dma.hbm_to_vmem [thread:$0]  %s0, 256, %s17, [#allocation3], 128, 128, 8
    $region5: #{tpu_custom_call.1} parent=1 // pred_fallthru
      _
    // Predicated region
    $region6: #{tpu_custom_call.1} parent=1 // pred_check
      _
    $region7: #{tpu_custom_call.1} parent=1 // pred_check_branch
      %24 = sbr.rel (0) target = $region9
    $region8: #{tpu_custom_call.1} parent=1 // pred_region
      %s26 = ssub.s32 512, 512
      %27 = vsyncadd [#allocation6], %s26
      %s28 = sshll.u32 [#allocation5], 4
      %s29 = int_to_ptr.vmem [resolvable:$true] %s28
      %34 = dma.hbm_to_vmem [thread:$0]  %s1, 512, %s29, [#allocation6], 128, 128, 8
    $region9: #{tpu_custom_call.1} parent=1 // pred_fallthru
      _
    // Predicated region
    $region10: #{tpu_custom_call.1} parent=1 // pred_check
      _
    $region11: #{tpu_custom_call.1} parent=1 // pred_check_branch
      %36 = sbr.rel (0) target = $region13
    $region12: #{tpu_custom_call.1} parent=1 // pred_region
      _
    $region13: #{tpu_custom_call.1} parent=1 // pred_fallthru
      _
    // Predicated region
    $region14: #{tpu_custom_call.1} parent=1 // pred_check
      _
    $region15: #{tpu_custom_call.1} parent=1 // pred_check_branch
      %38 = sbr.rel (0) target = $region17
    $region16: #{tpu_custom_call.1} parent=1 // pred_region
      %39 = dma.done [#allocation3], 256
    $region17: #{tpu_custom_call.1} parent=1 // pred_fallthru
      _
    // Predicated region
    $region18: #{tpu_custom_call.1} parent=1 // pred_check
      _
    $region19: #{tpu_custom_call.1} parent=1 // pred_check_branch
      %41 = sbr.rel (0) target = $region21
    $region20: #{tpu_custom_call.1} parent=1 // pred_region
      %42 = dma.done [#allocation6], 512
    $region21: #{tpu_custom_call.1} parent=1 // pred_fallthru
      _
    %v43 = vld [vmem:[#allocation2] sm:$0xff]
    %v44 = vld [vmem:[#allocation2 + $0x8] sm:$0xff]
    %v45 = vld [vmem:[#allocation5] sm:$0xff]
    %v46 = vld [vmem:[#allocation5 + $0x8] sm:$0xff]
    %v47 = vld [vmem:[#allocation5 + $0x10] sm:$0xff]
    %v48 = vld [vmem:[#allocation5 + $0x18] sm:$0xff]
    %v49 = vld [vmem:[%s2] sm:$0x1]
    %v51 = vlaneseq
    %v52 = vshrl.u32 %v51, 7
    %v53 = vsub.s32 0, %v52
    %v54 = vrot.slane %v49, %v53
    %vm56 = vcmask 261120
    %v58 = vsel %vm56, %v43, 0
    %v61 = vsel %vm56, %v44, 0
    %63 = vmatprep.subr.mxu0 0.0
    %64 = vmatpush1.msra.mxu0 %v45
    %65 = vmatprep.subr.mxu0 0.0
    %66 = vmatpush1.msra.mxu0 %v46
    %67 = vmatprep.subr.mxu0 0.0
    %68 = vmatpush1.msra.mxu0 %v47
    %69 = vmatprep.subr.mxu0 0.0
    %70 = vmatpush1.msra.mxu0 %v48
    %71 = vmatprep.subr.mxu0 0.0
    %72 = vmatpush1.msra.mxu0 0.0
    %73 = vmatprep.subr.mxu0 0.0
    %74 = vmatpush1.msra.mxu0 0.0
    %75 = vmatprep.subr.mxu0 0.0
    %76 = vmatpush1.msra.mxu0 0.0
    %77 = vmatprep.subr.mxu0 0.0
    %78 = vmatpush1.msra.mxu0 0.0
    %79 = vmatprep.subr.mxu0 0.0
    %80 = vmatpush1.msra.mxu0 0.0
    %81 = vmatprep.subr.mxu0 0.0
    %82 = vmatpush1.msra.mxu0 0.0
    %83 = vmatprep.subr.mxu0 0.0
    %84 = vmatpush1.msra.mxu0 0.0
    %85 = vmatprep.subr.mxu0 0.0
    %86 = vmatpush1.msra.mxu0 0.0
    %87 = vmatprep.subr.mxu0 0.0
    %88 = vmatpush1.msra.mxu0 0.0
    %89 = vmatprep.subr.mxu0 0.0
    %90 = vmatpush1.msra.mxu0 0.0
    %91 = vmatprep.subr.mxu0 0.0
    %92 = vmatpush1.msra.mxu0 0.0
    %93 = vmatprep.subr.mxu0 0.0
    %94 = vmatpush1.msra.mxu0 0.0
    %95 = vmatprep.subr.mxu0 0.0
    %96 = vmatpush1.msra.mxu0 0.0
    %97 = vmatprep.subr.mxu0 0.0
    %98 = vmatpush1.msra.mxu0 0.0
    %99 = vmatprep.subr.mxu0 0.0
    %100 = vmatpush1.msra.mxu0 0.0
    %101 = vmatprep.subr.mxu0 0.0
    %102 = vmatpush1.msra.mxu0 0.0
    %103 = vmatprep.subr.mxu0 0.0
    %104 = vmatpush1.msra.mxu0 0.0
    %105 = vmatprep.subr.mxu0 0.0
    %106 = vmatpush1.msra.mxu0 0.0
    %107 = vmatprep.subr.mxu0 0.0
    %108 = vmatpush1.msra.mxu0 0.0
    %109 = vmatprep.subr.mxu0 0.0
    %110 = vmatpush1.msra.mxu0 0.0
    %111 = vmatprep.subr.mxu0 0.0
    %112 = vmatpush1.msra.mxu0 0.0
    %113 = vmatprep.subr.mxu0 0.0
    %114 = vmatpush1.msra.mxu0 0.0
    %115 = vmatprep.subr.mxu0 0.0
    %116 = vmatpush1.msra.mxu0 0.0
    %117 = vmatprep.subr.mxu0 0.0
    %118 = vmatpush1.msra.mxu0 0.0
    %119 = vmatprep.subr.mxu0 0.0
    %120 = vmatpush1.msra.mxu0 0.0
    %121 = vmatprep.subr.mxu0 0.0
    %122 = vmatpush1.msra.mxu0 0.0
    %123 = vmatprep.subr.mxu0 0.0
    %124 = vmatpush1.msra.mxu0 0.0
    %125 = vmatprep.subr.mxu0 0.0
    %126 = vmatpush1.msra.mxu0 0.0
    %127 = vmatprep.mubr.f32.mxu0 0.0
    %128 = vmatmul.mubr.f32.gmra.mrb[0].mxu0 %v58
    %v129 = vpop.f32.mrb[0].mxu0
    %v130 = vadd.f32 %v54, %v129
    %v131 = vpop.f32.mrb[0].mxu0
    %132 = vmatprep.mubr.f32.mxu0 0.0
    %133 = vmatmul.mubr.f32.gmra.mrb[0].mxu0 %v61
    %v134 = vpop.f32.mrb[0].mxu0
    %v135 = vadd.f32 %v54, %v134
    %v136 = vpop.f32.mrb[0].mxu0
    %137 = vdwg.mxu0
    %v139 = vsel %vm56, %v130, 0
    %141 = vmatprep.subr.mxu0 0.0
    %142 = vmatpush1.xpose.msra.mxu0 %v139
    %143 = vmatprep.subr.mxu0 0.0
    %144 = vmatpush1.xpose.msra.mxu0 0.0
    %145 = vmatprep.subr.mxu0 0.0
    %146 = vmatpush1.xpose.msra.mxu0 0.0
    %147 = vmatprep.subr.mxu0 0.0
    %148 = vmatpush1.xpose.msra.mxu0 0.0
    %149 = vmatprep.subr.mxu0 0.0
    %150 = vmatpush1.xpose.msra.mxu0 0.0
    %151 = vmatprep.subr.mxu0 0.0
    %152 = vmatpush1.xpose.msra.mxu0 0.0
    %153 = vmatprep.subr.mxu0 0.0
    %154 = vmatpush1.xpose.msra.mxu0 0.0
    %155 = vmatprep.subr.mxu0 0.0
    %156 = vmatpush1.xpose.msra.mxu0 0.0
    %157 = vmatprep.subr.mxu0 0.0
    %158 = vmatpush1.xpose.msra.mxu0 0.0
    %159 = vmatprep.subr.mxu0 0.0
    %160 = vmatpush1.xpose.msra.mxu0 0.0
    %161 = vmatprep.subr.mxu0 0.0
    %162 = vmatpush1.xpose.msra.mxu0 0.0
    %163 = vmatprep.subr.mxu0 0.0
    %164 = vmatpush1.xpose.msra.mxu0 0.0
    %165 = vmatprep.subr.mxu0 0.0
    %166 = vmatpush1.xpose.msra.mxu0 0.0
    %167 = vmatprep.subr.mxu0 0.0
    %168 = vmatpush1.xpose.msra.mxu0 0.0
    %169 = vmatprep.subr.mxu0 0.0
    %170 = vmatpush1.xpose.msra.mxu0 0.0
    %171 = vmatprep.subr.mxu0 0.0
    %172 = vmatpush1.xpose.msra.mxu0 0.0
    %173 = vmatprep.subr.mxu0 0.0
    %174 = vmatpush1.xpose.msra.mxu0 0.0
    %175 = vmatprep.subr.mxu0 0.0
    %176 = vmatpush1.xpose.msra.mxu0 0.0
    %177 = vmatprep.subr.mxu0 0.0
    %178 = vmatpush1.xpose.msra.mxu0 0.0
    %179 = vmatprep.subr.mxu0 0.0
    %180 = vmatpush1.xpose.msra.mxu0 0.0
    %181 = vmatprep.subr.mxu0 0.0
    %182 = vmatpush1.xpose.msra.mxu0 0.0
    %183 = vmatprep.subr.mxu0 0.0
    %184 = vmatpush1.xpose.msra.mxu0 0.0
    %185 = vmatprep.subr.mxu0 0.0
    %186 = vmatpush1.xpose.msra.mxu0 0.0
    %187 = vmatprep.subr.mxu0 0.0
    %188 = vmatpush1.xpose.msra.mxu0 0.0
    %189 = vmatprep.subr.mxu0 0.0
    %190 = vmatpush1.xpose.msra.mxu0 0.0
    %191 = vmatprep.subr.mxu0 0.0
    %192 = vmatpush1.xpose.msra.mxu0 0.0
    %193 = vmatprep.subr.mxu0 0.0
    %194 = vmatpush1.xpose.msra.mxu0 0.0
    %195 = vmatprep.subr.mxu0 0.0
    %196 = vmatpush1.xpose.msra.mxu0 0.0
    %197 = vmatprep.subr.mxu0 0.0
    %198 = vmatpush1.xpose.msra.mxu0 0.0
    %199 = vmatprep.subr.mxu0 0.0
    %200 = vmatpush1.xpose.msra.mxu0 0.0
    %201 = vmatprep.subr.mxu0 0.0
    %202 = vmatpush1.xpose.msra.mxu0 0.0
    %203 = vmatprep.subr.mxu0 0.0
    %204 = vmatpush1.xpose.msra.mxu0 0.0
    %205 = vmatprep.mubr.f32.mxu0 0.0
    %206 = vmatmul.mubr.f32.gmra.mrb[0].mxu0 %v139
    %v207 = vpop.f32.mrb[0].mxu0
    %v208 = vadd.f32 0.0, %v207
    %v209 = vpop.f32.mrb[0].mxu0
    %210 = vdwg.mxu0
    %v212 = vsel %vm56, %v135, 0
    %214 = vmatprep.subr.mxu0 0.0
    %215 = vmatpush1.xpose.msra.mxu0 %v212
    %216 = vmatprep.subr.mxu0 0.0
    %217 = vmatpush1.xpose.msra.mxu0 0.0
    %218 = vmatprep.subr.mxu0 0.0
    %219 = vmatpush1.xpose.msra.mxu0 0.0
    %220 = vmatprep.subr.mxu0 0.0
    %221 = vmatpush1.xpose.msra.mxu0 0.0
    %222 = vmatprep.subr.mxu0 0.0
    %223 = vmatpush1.xpose.msra.mxu0 0.0
    %224 = vmatprep.subr.mxu0 0.0
    %225 = vmatpush1.xpose.msra.mxu0 0.0
    %226 = vmatprep.subr.mxu0 0.0
    %227 = vmatpush1.xpose.msra.mxu0 0.0
    %228 = vmatprep.subr.mxu0 0.0
    %229 = vmatpush1.xpose.msra.mxu0 0.0
    %230 = vmatprep.subr.mxu0 0.0
    %231 = vmatpush1.xpose.msra.mxu0 0.0
    %232 = vmatprep.subr.mxu0 0.0
    %233 = vmatpush1.xpose.msra.mxu0 0.0
    %234 = vmatprep.subr.mxu0 0.0
    %235 = vmatpush1.xpose.msra.mxu0 0.0
    %236 = vmatprep.subr.mxu0 0.0
    %237 = vmatpush1.xpose.msra.mxu0 0.0
    %238 = vmatprep.subr.mxu0 0.0
    %239 = vmatpush1.xpose.msra.mxu0 0.0
    %240 = vmatprep.subr.mxu0 0.0
    %241 = vmatpush1.xpose.msra.mxu0 0.0
    %242 = vmatprep.subr.mxu0 0.0
    %243 = vmatpush1.xpose.msra.mxu0 0.0
    %244 = vmatprep.subr.mxu0 0.0
    %245 = vmatpush1.xpose.msra.mxu0 0.0
    %246 = vmatprep.subr.mxu0 0.0
    %247 = vmatpush1.xpose.msra.mxu0 0.0
    %248 = vmatprep.subr.mxu0 0.0
    %249 = vmatpush1.xpose.msra.mxu0 0.0
    %250 = vmatprep.subr.mxu0 0.0
    %251 = vmatpush1.xpose.msra.mxu0 0.0
    %252 = vmatprep.subr.mxu0 0.0
    %253 = vmatpush1.xpose.msra.mxu0 0.0
    %254 = vmatprep.subr.mxu0 0.0
    %255 = vmatpush1.xpose.msra.mxu0 0.0
    %256 = vmatprep.subr.mxu0 0.0
    %257 = vmatpush1.xpose.msra.mxu0 0.0
    %258 = vmatprep.subr.mxu0 0.0
    %259 = vmatpush1.xpose.msra.mxu0 0.0
    %260 = vmatprep.subr.mxu0 0.0
    %261 = vmatpush1.xpose.msra.mxu0 0.0
    %262 = vmatprep.subr.mxu0 0.0
    %263 = vmatpush1.xpose.msra.mxu0 0.0
    %264 = vmatprep.subr.mxu0 0.0
    %265 = vmatpush1.xpose.msra.mxu0 0.0
    %266 = vmatprep.subr.mxu0 0.0
    %267 = vmatpush1.xpose.msra.mxu0 0.0
    %268 = vmatprep.subr.mxu0 0.0
    %269 = vmatpush1.xpose.msra.mxu0 0.0
    %270 = vmatprep.subr.mxu0 0.0
    %271 = vmatpush1.xpose.msra.mxu0 0.0
    %272 = vmatprep.subr.mxu0 0.0
    %273 = vmatpush1.xpose.msra.mxu0 0.0
    %274 = vmatprep.subr.mxu0 0.0
    %275 = vmatpush1.xpose.msra.mxu0 0.0
    %276 = vmatprep.subr.mxu0 0.0
    %277 = vmatpush1.xpose.msra.mxu0 0.0
    %278 = vmatprep.mubr.f32.mxu0 0.0
    %279 = vmatmul.mubr.f32.gmra.mrb[0].mxu0 %v212
    %v280 = vpop.f32.mrb[0].mxu0
    %v281 = vadd.f32 0.0, %v280
    %v282 = vpop.f32.mrb[0].mxu0
    %283 = vdwg.mxu0
    %v284 = vmul.f32 %v208, 0.17677669
    %v285 = vmul.f32 %v281, 0.17677669
    %vm286 = vcmask 64512
    %v287 = vsel %vm286, %v284, -inf
    %288 = vmax.xlane.f32.xlu0 %v287
    %v289 = vpop.xlane.xlu0 %288
    %v290 = vsel %vm286, %v285, -inf
    %291 = vmax.xlane.f32.xlu0 %v290
    %v292 = vpop.xlane.xlu0 %291
    %v293 = vsub.f32 %v284, %v289
    %v294 = vsub.f32 %v285, %v292
    %v295 = vmul.f32 %v293, 1.442695
    %v296 = vpow.pop %v295
    %v297 = vmul.f32 %v294, 1.442695
    %v298 = vpow.pop %v297
    %v299 = vsel %vm286, %v296, 0.0
    %300 = vadd.xlane.f32.xlu0 %v299
    %v301 = vpop.xlane.xlu0 %300
    %v302 = vsel %vm286, %v298, 0.0
    %303 = vadd.xlane.f32.xlu0 %v302
    %v304 = vpop.xlane.xlu0 %303
    %v305 = vrcp.pop %v301
    %v306 = vrcp.pop %v304
    %v307 = vmul.f32 %v296, %v305
    %v308 = vmul.f32 %v298, %v306
    %v310 = vsel %vm286, %v307, 0
    %312 = vmatprep.subr.mxu0 0.0
    %313 = vmatpush1.msra.mxu0 %v130
    %314 = vmatprep.subr.mxu0 0.0
    %315 = vmatpush1.msra.mxu0 0.0
    %316 = vmatprep.subr.mxu0 0.0
    %317 = vmatpush1.msra.mxu0 0.0
    %318 = vmatprep.subr.mxu0 0.0
    %319 = vmatpush1.msra.mxu0 0.0
    %320 = vmatprep.subr.mxu0 0.0
    %321 = vmatpush1.msra.mxu0 0.0
    %322 = vmatprep.subr.mxu0 0.0
    %323 = vmatpush1.msra.mxu0 0.0
    %324 = vmatprep.subr.mxu0 0.0
    %325 = vmatpush1.msra.mxu0 0.0
    %326 = vmatprep.subr.mxu0 0.0
    %327 = vmatpush1.msra.mxu0 0.0
    %328 = vmatprep.subr.mxu0 0.0
    %329 = vmatpush1.msra.mxu0 0.0
    %330 = vmatprep.subr.mxu0 0.0
    %331 = vmatpush1.msra.mxu0 0.0
    %332 = vmatprep.subr.mxu0 0.0
    %333 = vmatpush1.msra.mxu0 0.0
    %334 = vmatprep.subr.mxu0 0.0
    %335 = vmatpush1.msra.mxu0 0.0
    %336 = vmatprep.subr.mxu0 0.0
    %337 = vmatpush1.msra.mxu0 0.0
    %338 = vmatprep.subr.mxu0 0.0
    %339 = vmatpush1.msra.mxu0 0.0
    %340 = vmatprep.subr.mxu0 0.0
    %341 = vmatpush1.msra.mxu0 0.0
    %342 = vmatprep.subr.mxu0 0.0
    %343 = vmatpush1.msra.mxu0 0.0
    %344 = vmatprep.subr.mxu0 0.0
    %345 = vmatpush1.msra.mxu0 0.0
    %346 = vmatprep.subr.mxu0 0.0
    %347 = vmatpush1.msra.mxu0 0.0
    %348 = vmatprep.subr.mxu0 0.0
    %349 = vmatpush1.msra.mxu0 0.0
    %350 = vmatprep.subr.mxu0 0.0
    %351 = vmatpush1.msra.mxu0 0.0
    %352 = vmatprep.subr.mxu0 0.0
    %353 = vmatpush1.msra.mxu0 0.0
    %354 = vmatprep.subr.mxu0 0.0
    %355 = vmatpush1.msra.mxu0 0.0
    %356 = vmatprep.subr.mxu0 0.0
    %357 = vmatpush1.msra.mxu0 0.0
    %358 = vmatprep.subr.mxu0 0.0
    %359 = vmatpush1.msra.mxu0 0.0
    %360 = vmatprep.subr.mxu0 0.0
    %361 = vmatpush1.msra.mxu0 0.0
    %362 = vmatprep.subr.mxu0 0.0
    %363 = vmatpush1.msra.mxu0 0.0
    %364 = vmatprep.subr.mxu0 0.0
    %365 = vmatpush1.msra.mxu0 0.0
    %366 = vmatprep.subr.mxu0 0.0
    %367 = vmatpush1.msra.mxu0 0.0
    %368 = vmatprep.subr.mxu0 0.0
    %369 = vmatpush1.msra.mxu0 0.0
    %370 = vmatprep.subr.mxu0 0.0
    %371 = vmatpush1.msra.mxu0 0.0
    %372 = vmatprep.subr.mxu0 0.0
    %373 = vmatpush1.msra.mxu0 0.0
    %374 = vmatprep.subr.mxu0 0.0
    %375 = vmatpush1.msra.mxu0 0.0
    %376 = vmatprep.mubr.f32.mxu0 0.0
    %377 = vmatmul.mubr.f32.gmra.mrb[0].mxu0 %v310
    %v378 = vpop.f32.mrb[0].mxu0
    %v379 = vadd.f32 0.0, %v378
    %v380 = vpop.f32.mrb[0].mxu0
    %381 = vdwg.mxu0
    %v383 = vsel %vm286, %v308, 0
    %385 = vmatprep.subr.mxu0 0.0
    %386 = vmatpush1.msra.mxu0 %v135
    %387 = vmatprep.subr.mxu0 0.0
    %388 = vmatpush1.msra.mxu0 0.0
    %389 = vmatprep.subr.mxu0 0.0
    %390 = vmatpush1.msra.mxu0 0.0
    %391 = vmatprep.subr.mxu0 0.0
    %392 = vmatpush1.msra.mxu0 0.0
    %393 = vmatprep.subr.mxu0 0.0
    %394 = vmatpush1.msra.mxu0 0.0
    %395 = vmatprep.subr.mxu0 0.0
    %396 = vmatpush1.msra.mxu0 0.0
    %397 = vmatprep.subr.mxu0 0.0
    %398 = vmatpush1.msra.mxu0 0.0
    %399 = vmatprep.subr.mxu0 0.0
    %400 = vmatpush1.msra.mxu0 0.0
    %401 = vmatprep.subr.mxu0 0.0
    %402 = vmatpush1.msra.mxu0 0.0
    %403 = vmatprep.subr.mxu0 0.0
    %404 = vmatpush1.msra.mxu0 0.0
    %405 = vmatprep.subr.mxu0 0.0
    %406 = vmatpush1.msra.mxu0 0.0
    %407 = vmatprep.subr.mxu0 0.0
    %408 = vmatpush1.msra.mxu0 0.0
    %409 = vmatprep.subr.mxu0 0.0
    %410 = vmatpush1.msra.mxu0 0.0
    %411 = vmatprep.subr.mxu0 0.0
    %412 = vmatpush1.msra.mxu0 0.0
    %413 = vmatprep.subr.mxu0 0.0
    %414 = vmatpush1.msra.mxu0 0.0
    %415 = vmatprep.subr.mxu0 0.0
    %416 = vmatpush1.msra.mxu0 0.0
    %417 = vmatprep.subr.mxu0 0.0
    %418 = vmatpush1.msra.mxu0 0.0
    %419 = vmatprep.subr.mxu0 0.0
    %420 = vmatpush1.msra.mxu0 0.0
    %421 = vmatprep.subr.mxu0 0.0
    %422 = vmatpush1.msra.mxu0 0.0
    %423 = vmatprep.subr.mxu0 0.0
    %424 = vmatpush1.msra.mxu0 0.0
    %425 = vmatprep.subr.mxu0 0.0
    %426 = vmatpush1.msra.mxu0 0.0
    %427 = vmatprep.subr.mxu0 0.0
    %428 = vmatpush1.msra.mxu0 0.0
    %429 = vmatprep.subr.mxu0 0.0
    %430 = vmatpush1.msra.mxu0 0.0
    %431 = vmatprep.subr.mxu0 0.0
    %432 = vmatpush1.msra.mxu0 0.0
    %433 = vmatprep.subr.mxu0 0.0
    %434 = vmatpush1.msra.mxu0 0.0
    %435 = vmatprep.subr.mxu0 0.0
    %436 = vmatpush1.msra.mxu0 0.0
    %437 = vmatprep.subr.mxu0 0.0
    %438 = vmatpush1.msra.mxu0 0.0
    %439 = vmatprep.subr.mxu0 0.0
    %440 = vmatpush1.msra.mxu0 0.0
    %441 = vmatprep.subr.mxu0 0.0
    %442 = vmatpush1.msra.mxu0 0.0
    %443 = vmatprep.subr.mxu0 0.0
    %444 = vmatpush1.msra.mxu0 0.0
    %445 = vmatprep.subr.mxu0 0.0
    %446 = vmatpush1.msra.mxu0 0.0
    %447 = vmatprep.subr.mxu0 0.0
    %448 = vmatpush1.msra.mxu0 0.0
    %449 = vmatprep.mubr.f32.mxu0 0.0
    %450 = vmatmul.mubr.f32.gmra.mrb[0].mxu0 %v383
    %v451 = vpop.f32.mrb[0].mxu0
    %v452 = vadd.f32 0.0, %v451
    %v453 = vpop.f32.mrb[0].mxu0
    %454 = vdwg.mxu0
    %455 = vst.msk [vmem:[#allocation7] sm:$0xff] %vm56, %v379
    %456 = vst.msk [vmem:[#allocation7 + $0x8] sm:$0xff] %vm56, %v452
    // Predicated region
    $region22: #{tpu_custom_call.1} parent=1 // pred_check
      _
    $region23: #{tpu_custom_call.1} parent=1 // pred_check_branch
      %458 = sbr.rel (0) target = $region25
    $region24: #{tpu_custom_call.1} parent=1 // pred_region
      %s460 = ssub.s32 256, 256
      %461 = vsyncadd [#allocation4], %s460
      %s462 = sshll.u32 [#allocation7], 4
      %s463 = int_to_ptr.vmem [resolvable:$true] %s462
      %468 = dma.vmem_to_hbm [thread:$0]  %s463, 256, %s3, [#allocation4], 128, 128, 8
    $region25: #{tpu_custom_call.1} parent=1 // pred_fallthru
      _
    // Predicated region
    $region26: #{tpu_custom_call.1} parent=1 // pred_check
      _
    $region27: #{tpu_custom_call.1} parent=1 // pred_check_branch
      %470 = sbr.rel (0) target = $region29
    $region28: #{tpu_custom_call.1} parent=1 // pred_region
      %471 = dma.done [#allocation4], 256
    $region29: #{tpu_custom_call.1} parent=1 // pred_fallthru
      _
    %472 = vsyncpa [#allocation3], 1
    %473 = vsyncpa [#allocation6], 1
    %474 = vsyncpa [#allocation4], 1

</llo_original>
